<compile_context>
chip_gen: v7x
topology: tpu7x:2x2x1
jax: 0.10.0
libtpu: 0.0.40
codegen_flags: <defaults>
</compile_context>

<pallas_src>
import functools

import jax
import jax.numpy as jnp
from jax import lax
from jax.experimental import pallas as pl
from jax.experimental.pallas import tpu as pltpu


def _round_up(x, m):
    return ((x + m - 1) // m) * m


def _cdiv(a, b):
    return (a + b - 1) // b


def _vmem_capacity_bytes():
    """Physical VMEM of the current TPU generation (conservative fallback)."""
    try:
        return int(pltpu.get_tpu_info().vmem_capacity_bytes)
    except Exception:
        return 64 * 1024 * 1024          # v7x per-TC size: safe lower bound


# ----------------------------- Pallas kernel ------------------------------- #

def _resblock_chain_kernel(x_ref, wt_ref, b_ref, o_ref, *, num_layers):
    """Applies `num_layers` shared-weight ResBlocks to one row tile.

    x_ref : (TM, Hp) f32/bf16  input rows (lane-dense, Hp % 128 == 0)
    wt_ref: (Hp, Hp) bf16/f32  shared W^T (padded); constant across the grid
    b_ref : (1, Hp)  f32       shared bias (padded)
    o_ref : (TM, Hp) f32/bf16  output rows
    """
    h = x_ref[...].astype(jnp.float32)
    wt = wt_ref[...]                              # kept in its storage dtype
    # Hoist the bias broadcast out of the layer loop (JAX does not CSE
    # broadcast_in_dim; otherwise it is materialized num_layers times).
    b_bcast = jnp.broadcast_to(b_ref[...].astype(jnp.float32), h.shape)

    def layer(hh):
        # MXU operands in the weight's dtype (bf16 by default); f32 accumulate.
        y = jnp.dot(hh.astype(wt.dtype), wt,
                    preferred_element_type=jnp.float32) + b_bcast
        # SiLU and residual in f32 (v5e VPU/EUP have no bf16).
        return hh + y * jax.nn.sigmoid(y)

    if num_layers <= 4:
        # Short chains: static unroll lets LLO interleave MXU/EUP/VPU.
        for _ in range(num_layers):
            h = layer(h)
    else:
        # Deep chains: bound live ranges / code size with a rolled loop.
        h = lax.fori_loop(0, num_layers, lambda i, hh: layer(hh), h, unroll=2)

    o_ref[...] = h.astype(o_ref.dtype)


def resblock_chain(x, wt_padded, b_padded, *, num_layers, tile_m=1024,
                   alias_input=True):
    """x: (M, H); wt_padded: (Hp, Hp) pre-transposed (+ padded, bf16/f32);
    b_padded: (1, Hp) f32.  Returns (M, H) in x.dtype."""
    if num_layers == 0:
        return x
    M, H = x.shape
    Hp = wt_padded.shape[0]
    assert wt_padded.shape == (Hp, Hp) and b_padded.shape == (1, Hp)
    assert Hp % 128 == 0 and Hp >= H

    act_bytes = jnp.dtype(x.dtype).itemsize
    wt_bytes = jnp.dtype(wt_padded.dtype).itemsize

    # ---- VMEM budget (generation-aware: v7x has only 64 MiB physical). -----
    budget = int(0.85 * _vmem_capacity_bytes())
    fixed = Hp * Hp * wt_bytes + 2 * 8 * Hp * 4         # 1x weight + bias
    per_row = 2 * 2 * Hp * act_bytes + 4 * Hp * 4       # dbl-buf x/out + f32 temps
    if budget - fixed < 8 * per_row:
        # TODO(synk): K/N-tiled fallback needed for weights this large on v7x.
        raise ValueError(
            f"hidden_size={H} (padded {Hp}) does not fit the whole-weight-"
            f"resident kernel within {budget} bytes of VMEM; a K-tiled "
            "variant is required.")
    tile_cap = max(8, ((budget - fixed) // per_row) // 8 * 8)

    # ---- Row tiling: big tiles, minimal padding, >=2 grid steps (megacore). -
    tile_m = max(8, (tile_m // 8) * 8)
    tile_m = min(tile_m, tile_cap)
    M8 = _round_up(M, 8)
    n_tiles = max(1, _cdiv(M8, tile_m))
    if n_tiles == 1 and M8 >= 16:
        n_tiles = 2                    # let "parallel" shard across v7x's 2 TCs
    tile = min(_round_up(_cdiv(M8, n_tiles), 8), tile_m)
    Mp = tile * n_tiles                # row padding bounded by ~8*n_tiles rows

    # ---- Pad to (Mp, Hp): avoid rebuilding the whole slab when possible. ---
    if Hp == H:
        x_p = x if Mp == M else jnp.concatenate(
            [x, jnp.zeros((Mp - M, H), x.dtype)], axis=0)
    else:
        x_p = jnp.zeros((Mp, Hp), x.dtype).at[:M, :H].set(x)
    padded = (Mp != M) or (Hp != H)

    kernel = functools.partial(_resblock_chain_kernel, num_layers=num_layers)

    cost = pl.CostEstimate(
        flops=int(2 * num_layers * Mp * Hp * Hp + 5 * num_layers * Mp * Hp),
        transcendentals=int(num_layers * Mp * Hp),
        bytes_accessed=int(2 * Mp * Hp * act_bytes + Hp * Hp * wt_bytes
                           + Hp * 4),
    )

    def build_and_call(single_buffer_weight):
        # Grid-invariant weight/bias: single-buffer (no redundant 2nd copy).
        inv_kwargs = ({"pipeline_mode": pl.Buffered(1)}
                      if single_buffer_weight else {})
        vmem_need = (2 * 2 * tile * Hp * act_bytes          # x + out (dbl-buf)
                     + (1 if single_buffer_weight else 2) * Hp * Hp * wt_bytes
                     + 2 * 8 * Hp * 4                       # bias
                     + 4 * tile * Hp * 4)                   # f32 temporaries
        compiler_kwargs = dict(dimension_semantics=("parallel",))
        if int(vmem_need * 1.2) > 16 * 1024 * 1024:
            compiler_kwargs["vmem_limit_bytes"] = min(int(vmem_need * 1.2),
                                                      budget)
        # NOTE: outside a donating jit, aliasing the caller's own buffer makes
        # XLA insert a protective copy (safe); under a donating jit the input
        # slab is reused (clobbered) -- pass alias_input=False to avoid that.
        aliases = {0: 0} if alias_input else {}
        return pl.pallas_call(
            kernel,
            out_shape=jax.ShapeDtypeStruct((Mp, Hp), x.dtype),
            grid_spec=pltpu.PrefetchScalarGridSpec(
                num_scalar_prefetch=0,
                grid=(n_tiles,),
                in_specs=[
                    pl.BlockSpec((tile, Hp), lambda i: (i, 0)),        # rows
                    pl.BlockSpec((Hp, Hp), lambda i: (0, 0), **inv_kwargs),
                    pl.BlockSpec((1, Hp), lambda i: (0, 0), **inv_kwargs),
                ],
                out_specs=pl.BlockSpec((tile, Hp), lambda i: (i, 0)),
            ),
            compiler_params=pltpu.CompilerParams(**compiler_kwargs),
            cost_estimate=cost,
            input_output_aliases=aliases,
        )(x_p, wt_padded, b_padded)

    try:
        out = build_and_call(True)
    except Exception:
        # pipeline_mode / Buffered(1) not supported by this jax build ->
        # fall back to default double-buffered specs (correctness first).
        out = build_and_call(False)

    if padded:
        out = out[:M, :H]
    return out


# ------------------------------- Model glue -------------------------------- #

class PallasModel:
    """JAX/Pallas counterpart of `Model` (load_emb=False, num_res_layer >= 0)."""

    def __init__(self, hidden_size, vocab_size, num_res_layer, key,
                 mxu_dtype=jnp.bfloat16, act_dtype=jnp.float32, tile_m=1024):
        self.hidden_size = hidden_size
        self.vocab_size = vocab_size
        self.num_res_layer = num_res_layer
        self.mxu_dtype = mxu_dtype      # jnp.float32 keeps the MXU in f32
        self.act_dtype = act_dtype      # jnp.bfloat16 halves HBM traffic
        self.tile_m = tile_m

        k_b, k_head = jax.random.split(key, 2)
        # ResBlock linear: weight zero-initialized (torch.nn.init.zeros_),
        # bias default nn.Linear init: U(-1/sqrt(H), 1/sqrt(H)).
        bound = 1.0 / (hidden_size ** 0.5)
        res_w = jnp.zeros((hidden_size, hidden_size), jnp.float32)
        res_b = jax.random.uniform(k_b, (hidden_size,), jnp.float32,
                                   minval=-bound, maxval=bound)
        self.set_res_weights(res_w, res_b)
        # head: Linear(H -> vocab, bias=False); built but unused in forward().
        self.head_w = 0.02 * jax.random.normal(
            k_head, (vocab_size, hidden_size), jnp.float32)

    def set_res_weights(self, w, b):
        """w: (H, H) torch layout (out, in); b: (H,).
        Pre-transpose / pad to lane-dense Hp / cast once (not per forward)."""
        H = self.hidden_size
        Hp = _round_up(H, 128)
        self.res_w = w
        self.res_b = b
        wt = jnp.zeros((Hp, Hp), jnp.float32).at[:H, :H].set(w.T)
        self._wt_p = wt.astype(self.mxu_dtype)
        self._b_p = jnp.zeros((1, Hp), jnp.float32).at[0, :H].set(b)

    def forward(self, hidden_states, input_ids):
        B, S, H = hidden_states.shape
        # TODO(synk): use_emb / CrossNetV2 fusion omitted (external, no defn).
        # TODO(synk): Mamba decoder layer omitted (external, no defn) -> identity.
        if self.num_res_layer == 0:
            return hidden_states
        x = hidden_states.reshape(B * S, H).astype(self.act_dtype)
        y = resblock_chain(x, self._wt_p, self._b_p,
                           num_layers=self.num_res_layer, tile_m=self.tile_m)
        return y.reshape(B, S, H).astype(hidden_states.dtype)


# --------------------------------- main ------------------------------------ #

if __name__ == "__main__":
    key = jax.random.PRNGKey(0)
    k_model, k_hid, k_ids, k_w, k_hid2 = jax.random.split(key, 5)

    B, S, H, V = 2, 8, 128, 512
    num_res_layer = 2

    model = PallasModel(hidden_size=H, vocab_size=V,
                        num_res_layer=num_res_layer, key=k_model)

    hidden_states = jax.random.normal(k_hid, (B, S, H), jnp.float32)
    input_ids = jax.random.randint(k_ids, (B, S), 0, V, jnp.int32)

    out = jax.block_until_ready(model.forward(hidden_states, input_ids))
    assert out.shape == (B, S, H)

    def ref_chain(x, w, b, n):
        r = x
        for _ in range(n):
            y = r @ w.T + b
            r = r + y * jax.nn.sigmoid(y)
        return r

    # Check 1: faithful torch init (zero weight) -> result must match closely.
    ref = ref_chain(hidden_states, model.res_w, model.res_b, num_res_layer)
    assert jnp.allclose(out, ref, atol=1e-5, rtol=1e-5)

    # Check 2: non-zero weights so the MXU path is actually exercised
    # (bf16 matmul operands -> loose tolerance vs. the pure-f32 reference).
    w_rand = 0.05 * jax.random.normal(k_w, (H, H), jnp.float32)
    model.set_res_weights(w_rand, model.res_b)
    out2 = jax.block_until_ready(model.forward(hidden_states, input_ids))
    ref2 = ref_chain(hidden_states, w_rand, model.res_b, num_res_layer)
    assert jnp.allclose(out2, ref2, atol=5e-2, rtol=5e-2)

    # Check 3: ragged row count (exercises the minimal tail-row padding path)
    # and a deeper chain (exercises the fori_loop path).
    deep_layers = 6
    model_deep = PallasModel(hidden_size=H, vocab_size=V,
                             num_res_layer=deep_layers, key=k_model)
    model_deep.set_res_weights(w_rand, model.res_b)
    hs2 = jax.random.normal(k_hid2, (1, 37, H), jnp.float32)
    out3 = jax.block_until_ready(model_deep.forward(hs2, None))
    ref3 = ref_chain(hs2, w_rand, model.res_b, deep_layers)
    assert out3.shape == hs2.shape
    assert jnp.allclose(out3, ref3, atol=5e-2, rtol=5e-2)

    print("KERNEL_OK")
</pallas_src>

<mosaic_0001>
module attributes {stable_mosaic.version = 11 : i64} {
  func.func @_resblock_chain_kernel(%arg0: i32, %arg1: memref<8x128xf32, #tpu.memory_space<vmem>>, %arg2: memref<128x128xbf16, #tpu.memory_space<vmem>>, %arg3: memref<1x128xf32, #tpu.memory_space<vmem>>, %arg4: memref<8x128xf32, #tpu.memory_space<vmem>>) attributes {dimension_semantics = [#tpu.dimension_semantics<parallel>], iteration_bounds = array<i64: 2>, scalar_prefetch = 0 : i64, scratch_operands = 0 : i64, tpu.core_type = #tpu.core_type<tc>, window_params = [{transform_indices = @transform_0, window_bounds = array<i64: 8, 128>}, {pipeline_mode = #tpu.pipeline_mode<synchronous>, transform_indices = @transform_1, window_bounds = array<i64: 128, 128>}, {pipeline_mode = #tpu.pipeline_mode<synchronous>, transform_indices = @transform_2, window_bounds = array<i64: 1, 128>}, {transform_indices = @transform_3, window_bounds = array<i64: 8, 128>}]} {
    %c0 = arith.constant 0 : index
    %c0_0 = arith.constant 0 : index
    %0 = vector.load %arg1[%c0, %c0_0] : memref<8x128xf32, #tpu.memory_space<vmem>>, vector<8x128xf32>
    %c0_1 = arith.constant 0 : index
    %c0_2 = arith.constant 0 : index
    %1 = vector.load %arg2[%c0_1, %c0_2] : memref<128x128xbf16, #tpu.memory_space<vmem>>, vector<128x128xbf16>
    %c0_3 = arith.constant 0 : index
    %c0_4 = arith.constant 0 : index
    %2 = vector.load %arg3[%c0_3, %c0_4] : memref<1x128xf32, #tpu.memory_space<vmem>>, vector<1x128xf32>
    %3 = vector.shape_cast %2 : vector<1x128xf32> to vector<1x128xf32>
    %4 = vector.broadcast %3 : vector<1x128xf32> to vector<8x128xf32>
    %5 = arith.truncf %0 : vector<8x128xf32> to vector<8x128xbf16>
    %cst = arith.constant dense<0.000000e+00> : vector<8x128xf32>
    %6 = tpu.matmul %5, %1, %cst {dimension_numbers = #tpu.dot_dimension_numbers<[1], [0], [0], [1], [0, 0, 1, 1], [], []>} : vector<8x128xbf16>, vector<128x128xbf16>, vector<8x128xf32> -> vector<8x128xf32>
    %7 = arith.addf %6, %4 : vector<8x128xf32>
    %8 = arith.negf %7 : vector<8x128xf32>
    %9 = math.exp %8 : vector<8x128xf32>
    %cst_5 = arith.constant 1.000000e+00 : f32
    %10 = vector.broadcast %cst_5 : f32 to vector<8x128xf32>
    %11 = arith.addf %10, %9 : vector<8x128xf32>
    %12 = arith.divf %10, %11 : vector<8x128xf32>
    %13 = arith.mulf %7, %12 : vector<8x128xf32>
    %14 = arith.addf %0, %13 : vector<8x128xf32>
    %15 = arith.truncf %14 : vector<8x128xf32> to vector<8x128xbf16>
    %cst_6 = arith.constant dense<0.000000e+00> : vector<8x128xf32>
    %16 = tpu.matmul %15, %1, %cst_6 {dimension_numbers = #tpu.dot_dimension_numbers<[1], [0], [0], [1], [0, 0, 1, 1], [], []>} : vector<8x128xbf16>, vector<128x128xbf16>, vector<8x128xf32> -> vector<8x128xf32>
    %17 = arith.addf %16, %4 : vector<8x128xf32>
    %18 = arith.negf %17 : vector<8x128xf32>
    %19 = math.exp %18 : vector<8x128xf32>
    %cst_7 = arith.constant 1.000000e+00 : f32
    %20 = vector.broadcast %cst_7 : f32 to vector<8x128xf32>
    %21 = arith.addf %20, %19 : vector<8x128xf32>
    %22 = arith.divf %20, %21 : vector<8x128xf32>
    %23 = arith.mulf %17, %22 : vector<8x128xf32>
    %24 = arith.addf %14, %23 : vector<8x128xf32>
    %c0_8 = arith.constant 0 : index
    %c0_9 = arith.constant 0 : index
    %25 = vector.load %arg4[%c0_8, %c0_9] : memref<8x128xf32, #tpu.memory_space<vmem>>, vector<8x128xf32>
    tpu.vector_store %arg4[%c0_8, %c0_9], %24 {strides = array<i32>} : memref<8x128xf32, #tpu.memory_space<vmem>>, vector<8x128xf32>,
    return
  }
  func.func @transform_0(%arg0: i32) -> (i32, i32) {
    %c0_i32 = arith.constant 0 : i32
    %c0_i32_0 = arith.constant 0 : i32
    return %arg0, %c0_i32 : i32, i32
  }
  func.func @transform_1(%arg0: i32) -> (i32, i32) {
    %c0_i32 = arith.constant 0 : i32
    %c0_i32_0 = arith.constant 0 : i32
    %c0_i32_1 = arith.constant 0 : i32
    return %c0_i32, %c0_i32_0 : i32, i32
  }
  func.func @transform_2(%arg0: i32) -> (i32, i32) {
    %c0_i32 = arith.constant 0 : i32
    %c0_i32_0 = arith.constant 0 : i32
    %c0_i32_1 = arith.constant 0 : i32
    return %c0_i32, %c0_i32_0 : i32, i32
  }
  func.func @transform_3(%arg0: i32) -> (i32, i32) {
    %c0_i32 = arith.constant 0 : i32
    %c0_i32_0 = arith.constant 0 : i32
    return %arg0, %c0_i32 : i32, i32
  }
}

module attributes {stable_mosaic.version = 11 : i64} {
  func.func @_resblock_chain_kernel(%arg0: i32, %arg1: memref<8x128xf32, #tpu.memory_space<vmem>>, %arg2: memref<128x128xbf16, #tpu.memory_space<vmem>>, %arg3: memref<1x128xf32, #tpu.memory_space<vmem>>, %arg4: memref<8x128xf32, #tpu.memory_space<vmem>>) attributes {dimension_semantics = [#tpu.dimension_semantics<parallel>], iteration_bounds = array<i64: 2>, scalar_prefetch = 0 : i64, scratch_operands = 0 : i64, tpu.core_type = #tpu.core_type<tc>, window_params = [{transform_indices = @transform_0, window_bounds = array<i64: 8, 128>}, {pipeline_mode = #tpu.pipeline_mode<synchronous>, transform_indices = @transform_1, window_bounds = array<i64: 128, 128>}, {pipeline_mode = #tpu.pipeline_mode<synchronous>, transform_indices = @transform_2, window_bounds = array<i64: 1, 128>}, {transform_indices = @transform_3, window_bounds = array<i64: 8, 128>}]} {
    %c0 = arith.constant 0 : index
    %c0_0 = arith.constant 0 : index
    %0 = vector.load %arg1[%c0, %c0_0] : memref<8x128xf32, #tpu.memory_space<vmem>>, vector<8x128xf32>
    %c0_1 = arith.constant 0 : index
    %c0_2 = arith.constant 0 : index
    %1 = vector.load %arg2[%c0_1, %c0_2] : memref<128x128xbf16, #tpu.memory_space<vmem>>, vector<128x128xbf16>
    %c0_3 = arith.constant 0 : index
    %c0_4 = arith.constant 0 : index
    %2 = vector.load %arg3[%c0_3, %c0_4] : memref<1x128xf32, #tpu.memory_space<vmem>>, vector<1x128xf32>
    %3 = vector.shape_cast %2 : vector<1x128xf32> to vector<1x128xf32>
    %4 = vector.broadcast %3 : vector<1x128xf32> to vector<8x128xf32>
    %5 = arith.truncf %0 : vector<8x128xf32> to vector<8x128xbf16>
    %cst = arith.constant dense<0.000000e+00> : vector<8x128xf32>
    %6 = tpu.matmul %5, %1, %cst {dimension_numbers = #tpu.dot_dimension_numbers<[1], [0], [0], [1], [0, 0, 1, 1], [], []>} : vector<8x128xbf16>, vector<128x128xbf16>, vector<8x128xf32> -> vector<8x128xf32>
    %7 = arith.addf %6, %4 : vector<8x128xf32>
    %8 = arith.negf %7 : vector<8x128xf32>
    %9 = math.exp %8 : vector<8x128xf32>
    %cst_5 = arith.constant 1.000000e+00 : f32
    %10 = vector.broadcast %cst_5 : f32 to vector<8x128xf32>
    %11 = arith.addf %10, %9 : vector<8x128xf32>
    %12 = arith.divf %10, %11 : vector<8x128xf32>
    %13 = arith.mulf %7, %12 : vector<8x128xf32>
    %14 = arith.addf %0, %13 : vector<8x128xf32>
    %15 = arith.truncf %14 : vector<8x128xf32> to vector<8x128xbf16>
    %cst_6 = arith.constant dense<0.000000e+00> : vector<8x128xf32>
    %16 = tpu.matmul %15, %1, %cst_6 {dimension_numbers = #tpu.dot_dimension_numbers<[1], [0], [0], [1], [0, 0, 1, 1], [], []>} : vector<8x128xbf16>, vector<128x128xbf16>, vector<8x128xf32> -> vector<8x128xf32>
    %17 = arith.addf %16, %4 : vector<8x128xf32>
    %18 = arith.negf %17 : vector<8x128xf32>
    %19 = math.exp %18 : vector<8x128xf32>
    %cst_7 = arith.constant 1.000000e+00 : f32
    %20 = vector.broadcast %cst_7 : f32 to vector<8x128xf32>
    %21 = arith.addf %20, %19 : vector<8x128xf32>
    %22 = arith.divf %20, %21 : vector<8x128xf32>
    %23 = arith.mulf %17, %22 : vector<8x128xf32>
    %24 = arith.addf %14, %23 : vector<8x128xf32>
    %c0_8 = arith.constant 0 : index
    %c0_9 = arith.constant 0 : index
    %25 = vector.load %arg4[%c0_8, %c0_9] : memref<8x128xf32, #tpu.memory_space<vmem>>, vector<8x128xf32>
    tpu.vector_store %arg4[%c0_8, %c0_9], %24 {strides = array<i32>} : memref<8x128xf32, #tpu.memory_space<vmem>>, vector<8x128xf32>,
    return
  }
  func.func @transform_0(%arg0: i32) -> (i32, i32) {
    %c0_i32 = arith.constant 0 : i32
    %c0_i32_0 = arith.constant 0 : i32
    return %arg0, %c0_i32 : i32, i32
  }
  func.func @transform_1(%arg0: i32) -> (i32, i32) {
    %c0_i32 = arith.constant 0 : i32
    %c0_i32_0 = arith.constant 0 : i32
    %c0_i32_1 = arith.constant 0 : i32
    return %c0_i32, %c0_i32_0 : i32, i32
  }
  func.func @transform_2(%arg0: i32) -> (i32, i32) {
    %c0_i32 = arith.constant 0 : i32
    %c0_i32_0 = arith.constant 0 : i32
    %c0_i32_1 = arith.constant 0 : i32
    return %c0_i32, %c0_i32_0 : i32, i32
  }
  func.func @transform_3(%arg0: i32) -> (i32, i32) {
    %c0_i32 = arith.constant 0 : i32
    %c0_i32_0 = arith.constant 0 : i32
    return %arg0, %c0_i32 : i32, i32
  }
}

</mosaic_0001>

<llo_original>
// kernel: tpu_custom_call.1
$region0: #{tpu_custom_call.1}
  #allocation0 [shape = 'u32[]', space=smem, size = 0x4, offset = 0x4, fixed_abs, tag = 'smem constant byte address 0x4 - core index']
  #allocation1 [shape = 'u32[144,128]{1,0:T(1,128)}', space=vmem, size = 0x12000, scoped, tag = 'internal scratch']
  %s0 = inlined_call_operand.hbm [shape: f32[16,128], index: 0, kind: input, shape index: {}, may-alias: {0,3}]
  %s1 = inlined_call_operand.hbm [shape: bf16[128,128], index: 1, kind: input, shape index: {}]
  %s2 = inlined_call_operand.vmem [shape: f32[1,128], index: 2, kind: input, shape index: {}]
  %s3 = inlined_call_operand.hbm [shape: f32[16,128], index: 3, kind: output, shape index: {}, may-alias: {0,3}]
  %s4 = sld [smem:[#allocation0]]
  $region53: #{tpu_custom_call.1} parent=0
    _
  %s6 = ssub.s32 1, %s4
  %s7 = scalar_select 0, %s6, %s4
  $region1: #{tpu_custom_call.1} parent=0
    #allocation2 [shape = 'u8[8192]{0}', space=vmem, size = 0x2000, scoped, tag = 'input window, operand 0']
    #allocation3 [shape = 's32[2]{0}', space=sflag, size = 0x8, scoped, tag = 'scoped memory for tpu_custom_call.1']
    #allocation4 [shape = 's32[2]{0}', space=sflag, size = 0x8, scoped, tag = 'scoped memory for tpu_custom_call.1']
    #allocation5 [shape = 'u8[32768]{0}', space=vmem, size = 0x8000, scoped, tag = 'input window, operand 1, single buffered']
    #allocation6 [shape = 's32[1]{0}', space=sflag, size = 0x4, scoped, tag = 'scoped memory for tpu_custom_call.1']
    #allocation7 [shape = 'u8[8192]{0}', space=vmem, size = 0x2000, scoped, tag = 'output window, operand 0']
    %8 = vsyncpa [#allocation3], 0
    %s9 = scalar_lea.sflag [#allocation3], 1
    %10 = vsyncpa %s9, 0
    %11 = vsyncpa [#allocation6], 0
    %12 = vsyncpa [#allocation4], 0
    %s13 = scalar_lea.sflag [#allocation4], 1
    %14 = vsyncpa %s13, 0
    loop: start=0, step=1, limit=4
    $region2: #{tpu_custom_call.1} parent=1 // loop_pre_header
      _
    $region3: #{tpu_custom_call.1} parent=1 // loop_header
      %s16 = sphi 0, %s20
      %p17 = scmp.ge.s32.totalorder %s16, 4
      %s26 = sphi 0, %s28
      %s29 = sphi 0, %s26
      %s30 = sphi 0, %s29
      %s46 = sphi 0, %s30
      %s50 = sphi 0, %s50
      %s52 = sphi 0, %s50
      %s53 = sphi 0, %s52
      %s67 = sphi 0, %s53
      %s71 = sphi 0, %s71
      %s73 = sphi 0, %s71
      %s74 = sphi 0, %s73
      %s88 = sphi 0, %s74
      %s94 = sphi 0, %s96
      %s97 = sphi 0, %s94
      %s98 = sphi 0, %s97
      %s114 = sphi 0, %s98
    $region4: #{tpu_custom_call.1} parent=1 // loop_header_branch
      %19 = sbr.rel (%p17) target = $region8
    $region5: #{tpu_custom_call.1} parent=1 // loop_body
      %s21 = ssub.s32 %s16, 1
      %s22 = ssub.s32 %s16, 2
      %s23 = sadd.s32 %s16, 1
      %s24 = ssub.s32 %s16, %s23
      %p25 = scmp.eq.s32.totalorder %s24, 0
      %s27 = sadd.s32 %s26, 1
      %s28 = scalar_select %p25, %s26, %s27
      %p31 = pneg %p25
      %p32 = scmp.eq.s32.totalorder %s16, 1
      %p33 = por %p31, %p32
      %p34 = scmp.ne.s32.totalorder %s26, %s29
      %p35 = scmp.eq.s32.totalorder %s16, 0
      %p36 = por %p34, %p35
      %p37 = scmp.ne.s32.totalorder %s26, %s29
      %p38 = scmp.eq.s32.totalorder %s21, 1
      %p39 = por %p37, %p38
      %p40 = scmp.ne.s32.totalorder %s29, %s30
      %p41 = scmp.eq.s32.totalorder %s21, 0
      %p42 = por %p40, %p41
      %p43 = scmp.ne.s32.totalorder %s29, %s30
      %p44 = scmp.eq.s32.totalorder %s22, 1
      %p45 = por %p43, %p44
      %p47 = scmp.ne.s32.totalorder %s30, %s46
      %p48 = scmp.eq.s32.totalorder %s22, 0
      %p49 = por %p47, %p48
      %s51 = sadd.s32 %s50, 1
      %p54 = scmp.eq.s32.totalorder %s16, 1
      %p55 = scmp.ne.s32.totalorder %s50, %s52
      %p56 = scmp.eq.s32.totalorder %s16, 0
      %p57 = por %p55, %p56
      %p58 = scmp.ne.s32.totalorder %s50, %s52
      %p59 = scmp.eq.s32.totalorder %s21, 1
      %p60 = por %p58, %p59
      %p61 = scmp.ne.s32.totalorder %s52, %s53
      %p62 = scmp.eq.s32.totalorder %s21, 0
      %p63 = por %p61, %p62
      %p64 = scmp.ne.s32.totalorder %s52, %s53
      %p65 = scmp.eq.s32.totalorder %s22, 1
      %p66 = por %p64, %p65
      %p68 = scmp.ne.s32.totalorder %s53, %s67
      %p69 = scmp.eq.s32.totalorder %s22, 0
      %p70 = por %p68, %p69
      %s72 = sadd.s32 %s71, 1
      %p75 = scmp.eq.s32.totalorder %s16, 1
      %p76 = scmp.ne.s32.totalorder %s71, %s73
      %p77 = scmp.eq.s32.totalorder %s16, 0
      %p78 = por %p76, %p77
      %p79 = scmp.ne.s32.totalorder %s71, %s73
      %p80 = scmp.eq.s32.totalorder %s21, 1
      %p81 = por %p79, %p80
      %p82 = scmp.ne.s32.totalorder %s73, %s74
      %p83 = scmp.eq.s32.totalorder %s21, 0
      %p84 = por %p82, %p83
      %p85 = scmp.ne.s32.totalorder %s73, %s74
      %p86 = scmp.eq.s32.totalorder %s22, 1
      %p87 = por %p85, %p86
      %p89 = scmp.ne.s32.totalorder %s74, %s88
      %p90 = scmp.eq.s32.totalorder %s22, 0
      %p91 = por %p89, %p90
      %s92 = ssub.s32 %s16, %s23
      %p93 = scmp.eq.s32.totalorder %s92, 0
      %s95 = sadd.s32 %s94, 1
      %s96 = scalar_select %p93, %s94, %s95
      %p99 = pneg %p93
      %p100 = scmp.eq.s32.totalorder %s16, 1
      %p101 = por %p99, %p100
      %p102 = scmp.ne.s32.totalorder %s94, %s97
      %p103 = scmp.eq.s32.totalorder %s16, 0
      %p104 = por %p102, %p103
      %p105 = scmp.ne.s32.totalorder %s94, %s97
      %p106 = scmp.eq.s32.totalorder %s21, 1
      %p107 = por %p105, %p106
      %p108 = scmp.ne.s32.totalorder %s97, %s98
      %p109 = scmp.eq.s32.totalorder %s21, 0
      %p110 = por %p108, %p109
      %p111 = scmp.ne.s32.totalorder %s97, %s98
      %p112 = scmp.eq.s32.totalorder %s22, 1
      %p113 = por %p111, %p112
      %p115 = scmp.ne.s32.totalorder %s98, %s114
      %p116 = scmp.eq.s32.totalorder %s22, 0
      %p117 = por %p115, %p116
      %p118 = scmp.le.s32.totalorder 1, %s16
      %p119 = scmp.lt.s32.totalorder %s16, 3
      %p120 = pnand %p118, %p119
      %p121 = pneg %p120
      // Predicated region
      $region9: #{tpu_custom_call.1} parent=5 // pred_check
        _
      $region10: #{tpu_custom_call.1} parent=5 // pred_check_branch
        %123 = sbr.rel (%p120) target = $region12
      $region11: #{tpu_custom_call.1} parent=5 // pred_region
        %s124 = ssub.s32 %s16, 1
        // Predicated region
        $region13: #{tpu_custom_call.1} parent=11 // pred_check
          %p125 = pneg %p63
        $region14: #{tpu_custom_call.1} parent=11 // pred_check_branch
          %127 = sbr.rel (%p125) target = $region16
        $region15: #{tpu_custom_call.1} parent=11 // pred_region
          %s129 = ssub.s32 1024, 1024
          %130 = vsyncadd [#allocation6], %s129
          %s131 = sshll.u32 [#allocation5], 4
          %s132 = int_to_ptr.vmem [resolvable:$true] %s131
          %137 = dma.hbm_to_vmem [thread:$0]  %s1, 1024, %s132, [#allocation6], 64, 64, 4
        $region16: #{tpu_custom_call.1} parent=11 // pred_fallthru
          _
        // Predicated region
        $region17: #{tpu_custom_call.1} parent=11 // pred_check
          %p138 = pneg %p84
        $region18: #{tpu_custom_call.1} parent=11 // pred_check_branch
          %140 = sbr.rel (%p138) target = $region20
        $region19: #{tpu_custom_call.1} parent=11 // pred_region
          _
        $region20: #{tpu_custom_call.1} parent=11 // pred_fallthru
          _
      $region12: #{tpu_custom_call.1} parent=5 // pred_fallthru
        _
      %p141 = scmp.lt.s32.totalorder %s16, 2
      // Predicated region
      $region21: #{tpu_custom_call.1} parent=5 // pred_check
        %p142 = pneg %p141
      $region22: #{tpu_custom_call.1} parent=5 // pred_check_branch
        %144 = sbr.rel (%p142) target = $region24
      $region23: #{tpu_custom_call.1} parent=5 // pred_region
        // Predicated region
        $region25: #{tpu_custom_call.1} parent=23 // pred_check
          %p145 = pneg %p36
        $region26: #{tpu_custom_call.1} parent=23 // pred_check_branch
          %147 = sbr.rel (%p145) target = $region28
        $region27: #{tpu_custom_call.1} parent=23 // pred_region
          %s148 = sand.u32 %s26, 1
          %s149 = scalar_lea.sflag [#allocation3], %s148
          %s150 = sand.u32 %s26, 1
          %s151 = smul.addr %s150, 8
          %s152 = scalar_lea.vmem [#allocation2], %s151
          %s154 = ssub.s32 128, 128
          %155 = vsyncadd %s149, %s154
          %s156 = smul.addr %s16, 128
          %s157 = scalar_lea.hbm %s0, %s156
          %s159 = sshll.u32 %s152, 4
          %s160 = int_to_ptr.vmem [resolvable:$true] %s159
          %162 = dma.hbm_to_vmem [thread:$0]  %s157, 128, %s160, %s149
        $region28: #{tpu_custom_call.1} parent=23 // pred_fallthru
          _
      $region24: #{tpu_custom_call.1} parent=5 // pred_fallthru
        _
      %p163 = scmp.le.s32.totalorder 1, %s16
      %p164 = scmp.lt.s32.totalorder %s16, 3
      %p165 = pnand %p163, %p164
      %p166 = pneg %p165
      // Predicated region
      $region29: #{tpu_custom_call.1} parent=5 // pred_check
        _
      $region30: #{tpu_custom_call.1} parent=5 // pred_check_branch
        %168 = sbr.rel (%p165) target = $region32
      $region31: #{tpu_custom_call.1} parent=5 // pred_region
        %s169 = ssub.s32 %s16, 1
        %s170 = sand.u32 %s29, 1
        %s171 = scalar_lea.sflag [#allocation3], %s170
        %s172 = sand.u32 %s29, 1
        %s173 = smul.addr %s172, 8
        %s174 = scalar_lea.vmem [#allocation2], %s173
        // Predicated region
        $region33: #{tpu_custom_call.1} parent=31 // pred_check
          %p175 = pneg %p42
        $region34: #{tpu_custom_call.1} parent=31 // pred_check_branch
          %177 = sbr.rel (%p175) target = $region36
        $region35: #{tpu_custom_call.1} parent=31 // pred_region
          %178 = dma.done %s171, 128
        $region36: #{tpu_custom_call.1} parent=31 // pred_fallthru
          _
        // Predicated region
        $region37: #{tpu_custom_call.1} parent=31 // pred_check
          %p179 = pneg %p63
        $region38: #{tpu_custom_call.1} parent=31 // pred_check_branch
          %181 = sbr.rel (%p179) target = $region40
        $region39: #{tpu_custom_call.1} parent=31 // pred_region
          %182 = dma.done [#allocation6], 1024
        $region40: #{tpu_custom_call.1} parent=31 // pred_fallthru
          _
        %s183 = sand.u32 %s29, 1
        %s184 = scalar_lea.sflag [#allocation3], %s183
        %s185 = sand.u32 %s29, 1
        %s186 = smul.addr %s185, 8
        %s187 = scalar_lea.vmem [#allocation2], %s186
        %p188 = pneg %p42
        %p189 = pneg %p39
        %p190 = pneg %p63
        %p191 = pneg %p60
        %p192 = pneg %p84
        %p193 = pneg %p81
        %p194 = pneg %p110
        %p195 = pneg %p107
        %s196 = sand.u32 %s97, 1
        %s197 = scalar_lea.sflag [#allocation4], %s196
        %s198 = sand.u32 %s97, 1
        %s199 = smul.addr %s198, 8
        %s200 = scalar_lea.vmem [#allocation7], %s199
        %v202 = vld [vmem:[%s174] sm:$0xff]
        %v203 = vld [vmem:[#allocation5] sm:$0xf]
        %v204 = vld [vmem:[#allocation5 + $0x4] sm:$0xf]
        %v205 = vld [vmem:[#allocation5 + $0x8] sm:$0xf]
        %v206 = vld [vmem:[#allocation5 + $0xc] sm:$0xf]
        %v207 = vld [vmem:[#allocation5 + $0x10] sm:$0xf]
        %v208 = vld [vmem:[#allocation5 + $0x14] sm:$0xf]
        %v209 = vld [vmem:[#allocation5 + $0x18] sm:$0xf]
        %v210 = vld [vmem:[#allocation5 + $0x1c] sm:$0xf]
        %v211 = vld [vmem:[#allocation5 + $0x20] sm:$0xf]
        %v212 = vld [vmem:[#allocation5 + $0x24] sm:$0xf]
        %v213 = vld [vmem:[#allocation5 + $0x28] sm:$0xf]
        %v214 = vld [vmem:[#allocation5 + $0x2c] sm:$0xf]
        %v215 = vld [vmem:[#allocation5 + $0x30] sm:$0xf]
        %v216 = vld [vmem:[#allocation5 + $0x34] sm:$0xf]
        %v217 = vld [vmem:[#allocation5 + $0x38] sm:$0xf]
        %v218 = vld [vmem:[#allocation5 + $0x3c] sm:$0xf]
        %v219 = vld [vmem:[%s2] sm:$0x1]
        %v221 = vlaneseq
        %v222 = vshrl.u32 %v221, 7
        %v223 = vsub.s32 0, %v222
        %v224 = vrot.slane %v219, %v223
        %v226 = vpack.c.bf16 %v202, %v202
        %v243 = vunpack.c.l.b16 %v203
        %v244 = vunpack.c.l.b16 %v204
        %v245 = vunpack.c.l.b16 %v205
        %v246 = vunpack.c.l.b16 %v206
        %v247 = vunpack.c.l.b16 %v207
        %v248 = vunpack.c.l.b16 %v208
        %v249 = vunpack.c.l.b16 %v209
        %v250 = vunpack.c.l.b16 %v210
        %v251 = vunpack.c.l.b16 %v211
        %v252 = vunpack.c.l.b16 %v212
        %v253 = vunpack.c.l.b16 %v213
        %v254 = vunpack.c.l.b16 %v214
        %v255 = vunpack.c.l.b16 %v215
        %v256 = vunpack.c.l.b16 %v216
        %v257 = vunpack.c.l.b16 %v217
        %v258 = vunpack.c.l.b16 %v218
        %v259 = vpack.c.b16 %v244, %v243
        %v260 = vpack.c.b16 %v246, %v245
        %v261 = vpack.c.b16 %v248, %v247
        %v262 = vpack.c.b16 %v250, %v249
        %v263 = vpack.c.b16 %v252, %v251
        %v264 = vpack.c.b16 %v254, %v253
        %v265 = vpack.c.b16 %v256, %v255
        %v266 = vpack.c.b16 %v258, %v257
        %275 = vmatprep.subr.bf16.mxu0 0
        %276 = vmatpush1.bf16.msra.mxu0 %v259
        %277 = vmatprep.subr.bf16.mxu0 0
        %278 = vmatpush1.bf16.msra.mxu0 %v260
        %279 = vmatprep.subr.bf16.mxu0 0
        %280 = vmatpush1.bf16.msra.mxu0 %v261
        %281 = vmatprep.subr.bf16.mxu0 0
        %282 = vmatpush1.bf16.msra.mxu0 %v262
        %283 = vmatprep.subr.bf16.mxu0 0
        %284 = vmatpush1.bf16.msra.mxu0 %v263
        %285 = vmatprep.subr.bf16.mxu0 0
        %286 = vmatpush1.bf16.msra.mxu0 %v264
        %287 = vmatprep.subr.bf16.mxu0 0
        %288 = vmatpush1.bf16.msra.mxu0 %v265
        %289 = vmatprep.subr.bf16.mxu0 0
        %290 = vmatpush1.bf16.msra.mxu0 %v266
        %291 = vmatprep.subr.bf16.mxu0 0
        %292 = vmatpush1.bf16.msra.mxu0 0
        %293 = vmatprep.subr.bf16.mxu0 0
        %294 = vmatpush1.bf16.msra.mxu0 0
        %295 = vmatprep.subr.bf16.mxu0 0
        %296 = vmatpush1.bf16.msra.mxu0 0
        %297 = vmatprep.subr.bf16.mxu0 0
        %298 = vmatpush1.bf16.msra.mxu0 0
        %299 = vmatprep.subr.bf16.mxu0 0
        %300 = vmatpush1.bf16.msra.mxu0 0
        %301 = vmatprep.subr.bf16.mxu0 0
        %302 = vmatpush1.bf16.msra.mxu0 0
        %303 = vmatprep.subr.bf16.mxu0 0
        %304 = vmatpush1.bf16.msra.mxu0 0
        %305 = vmatprep.subr.bf16.mxu0 0
        %306 = vmatpush1.bf16.msra.mxu0 0
        %307 = vmatprep.mubr.bf16.mxu0 0
        %308 = vmatmul.mubr.bf16.gmra.mrb[0].mxu0 %v226
        %v309 = vpop.f32.mrb[0].mxu0
        %v310 = vadd.f32 %v224, %v309
        %v311 = vpop.f32.mrb[0].mxu0
        %v312 = vpop.f32.mrb[0].mxu0
        %v313 = vpop.f32.mrb[0].mxu0
        %314 = vdwg.mxu0
        %v315 = vxor.u32 %v310, 2147483648
        %v316 = vmul.f32 %v315, 1.442695
        %v317 = vpow.pop %v316
        %v318 = vadd.f32 %v317, 1.0
        %v319 = vrcp.pop %v318
        %v320 = vmul.f32 1.0, %v319
        %v321 = vmul.f32 %v310, %v320
        %v322 = vadd.f32 %v202, %v321
        %v323 = vpack.c.bf16 %v322, %v322
        %324 = vmatprep.subr.bf16.mxu0 0
        %325 = vmatpush1.bf16.msra.mxu0 %v259
        %326 = vmatprep.subr.bf16.mxu0 0
        %327 = vmatpush1.bf16.msra.mxu0 %v260
        %328 = vmatprep.subr.bf16.mxu0 0
        %329 = vmatpush1.bf16.msra.mxu0 %v261
        %330 = vmatprep.subr.bf16.mxu0 0
        %331 = vmatpush1.bf16.msra.mxu0 %v262
        %332 = vmatprep.subr.bf16.mxu0 0
        %333 = vmatpush1.bf16.msra.mxu0 %v263
        %334 = vmatprep.subr.bf16.mxu0 0
        %335 = vmatpush1.bf16.msra.mxu0 %v264
        %336 = vmatprep.subr.bf16.mxu0 0
        %337 = vmatpush1.bf16.msra.mxu0 %v265
        %338 = vmatprep.subr.bf16.mxu0 0
        %339 = vmatpush1.bf16.msra.mxu0 %v266
        %340 = vmatprep.subr.bf16.mxu0 0
        %341 = vmatpush1.bf16.msra.mxu0 0
        %342 = vmatprep.subr.bf16.mxu0 0
        %343 = vmatpush1.bf16.msra.mxu0 0
        %344 = vmatprep.subr.bf16.mxu0 0
        %345 = vmatpush1.bf16.msra.mxu0 0
        %346 = vmatprep.subr.bf16.mxu0 0
        %347 = vmatpush1.bf16.msra.mxu0 0
        %348 = vmatprep.subr.bf16.mxu0 0
        %349 = vmatpush1.bf16.msra.mxu0 0
        %350 = vmatprep.subr.bf16.mxu0 0
        %351 = vmatpush1.bf16.msra.mxu0 0
        %352 = vmatprep.subr.bf16.mxu0 0
        %353 = vmatpush1.bf16.msra.mxu0 0
        %354 = vmatprep.subr.bf16.mxu0 0
        %355 = vmatpush1.bf16.msra.mxu0 0
        %356 = vmatprep.mubr.bf16.mxu0 0
        %357 = vmatmul.mubr.bf16.gmra.mrb[0].mxu0 %v323
        %v358 = vpop.f32.mrb[0].mxu0
        %v359 = vadd.f32 %v224, %v358
        %v360 = vpop.f32.mrb[0].mxu0
        %v361 = vpop.f32.mrb[0].mxu0
        %v362 = vpop.f32.mrb[0].mxu0
        %363 = vdwg.mxu0
        %v364 = vxor.u32 %v359, 2147483648
        %v365 = vmul.f32 %v364, 1.442695
        %v366 = vpow.pop %v365
        %v367 = vadd.f32 %v366, 1.0
        %v368 = vrcp.pop %v367
        %v369 = vmul.f32 1.0, %v368
        %v370 = vmul.f32 %v359, %v369
        %v371 = vadd.f32 %v322, %v370
        %372 = vst [vmem:[%s200] sm:$0xff] %v371
        %s373 = sand.u32 %s97, 1
        %s374 = scalar_lea.sflag [#allocation4], %s373
        %s375 = sand.u32 %s97, 1
        %s376 = smul.addr %s375, 8
        %s377 = scalar_lea.vmem [#allocation7], %s376
        // Predicated region
        $region41: #{tpu_custom_call.1} parent=31 // pred_check
          %p378 = pneg %p107
        $region42: #{tpu_custom_call.1} parent=31 // pred_check_branch
          %380 = sbr.rel (%p378) target = $region44
        $region43: #{tpu_custom_call.1} parent=31 // pred_region
          %s382 = ssub.s32 128, 128
          %383 = vsyncadd %s374, %s382
          %s384 = smul.addr %s21, 128
          %s385 = scalar_lea.hbm %s3, %s384
          %s387 = sshll.u32 %s377, 4
          %s388 = int_to_ptr.vmem [resolvable:$true] %s387
          %390 = dma.vmem_to_hbm [thread:$0]  %s388, 128, %s385, %s374
        $region44: #{tpu_custom_call.1} parent=31 // pred_fallthru
          _
      $region32: #{tpu_custom_call.1} parent=5 // pred_fallthru
        _
      %p391 = scmp.le.s32.totalorder 2, %s16
      // Predicated region
      $region45: #{tpu_custom_call.1} parent=5 // pred_check
        %p392 = pneg %p391
      $region46: #{tpu_custom_call.1} parent=5 // pred_check_branch
        %394 = sbr.rel (%p392) target = $region48
      $region47: #{tpu_custom_call.1} parent=5 // pred_region
        %s395 = ssub.s32 %s16, 2
        // Predicated region
        $region49: #{tpu_custom_call.1} parent=47 // pred_check
          %p396 = pneg %p113
        $region50: #{tpu_custom_call.1} parent=47 // pred_check_branch
          %398 = sbr.rel (%p396) target = $region52
        $region51: #{tpu_custom_call.1} parent=47 // pred_region
          %s399 = sand.u32 %s98, 1
          %s400 = scalar_lea.sflag [#allocation4], %s399
          %s401 = sand.u32 %s98, 1
          %s402 = smul.addr %s401, 8
          %s403 = scalar_lea.vmem [#allocation7], %s402
          %404 = dma.done %s400, 128
        $region52: #{tpu_custom_call.1} parent=47 // pred_fallthru
          _
      $region48: #{tpu_custom_call.1} parent=5 // pred_fallthru
        _
    $region6: #{tpu_custom_call.1} parent=1 // loop_footer
      %s20 = sadd.s32 1, %s16
    $region7: #{tpu_custom_call.1} parent=1 // loop_footer_branch
      %15 = sbr.rel target = $region3
    $region8: #{tpu_custom_call.1} parent=1 // loop_exit
      _
    %405 = vsyncpa [#allocation3], 1
    %s406 = scalar_lea.sflag [#allocation3], 1
    %407 = vsyncpa %s406, 1
    %408 = vsyncpa [#allocation6], 1
    %409 = vsyncpa [#allocation4], 1
    %s410 = scalar_lea.sflag [#allocation4], 1
    %411 = vsyncpa %s410, 1

// kernel: tpu_custom_call.1
$region0: #{tpu_custom_call.1}
  #allocation0 [shape = 'u32[]', space=smem, size = 0x4, offset = 0x4, fixed_abs, tag = 'smem constant byte address 0x4 - core index']
  #allocation1 [shape = 'u32[144,128]{1,0:T(1,128)}', space=vmem, size = 0x12000, scoped, tag = 'internal scratch']
  %s0 = inlined_call_operand.hbm [shape: f32[16,128], index: 0, kind: input, shape index: {}, may-alias: {0,3}]
  %s1 = inlined_call_operand.hbm [shape: bf16[128,128], index: 1, kind: input, shape index: {}]
  %s2 = inlined_call_operand.vmem [shape: f32[1,128], index: 2, kind: input, shape index: {}]
  %s3 = inlined_call_operand.hbm [shape: f32[16,128], index: 3, kind: output, shape index: {}, may-alias: {0,3}]
  %s4 = sld [smem:[#allocation0]]
  $region53: #{tpu_custom_call.1} parent=0
    _
  %s6 = ssub.s32 1, %s4
  %s7 = scalar_select 0, %s6, %s4
  $region1: #{tpu_custom_call.1} parent=0
    #allocation2 [shape = 'u8[8192]{0}', space=vmem, size = 0x2000, scoped, tag = 'input window, operand 0']
    #allocation3 [shape = 's32[2]{0}', space=sflag, size = 0x8, scoped, tag = 'scoped memory for tpu_custom_call.1']
    #allocation4 [shape = 's32[2]{0}', space=sflag, size = 0x8, scoped, tag = 'scoped memory for tpu_custom_call.1']
    #allocation5 [shape = 'u8[32768]{0}', space=vmem, size = 0x8000, scoped, tag = 'input window, operand 1, single buffered']
    #allocation6 [shape = 's32[1]{0}', space=sflag, size = 0x4, scoped, tag = 'scoped memory for tpu_custom_call.1']
    #allocation7 [shape = 'u8[8192]{0}', space=vmem, size = 0x2000, scoped, tag = 'output window, operand 0']
    %8 = vsyncpa [#allocation3], 0
    %s9 = scalar_lea.sflag [#allocation3], 1
    %10 = vsyncpa %s9, 0
    %11 = vsyncpa [#allocation6], 0
    %12 = vsyncpa [#allocation4], 0
    %s13 = scalar_lea.sflag [#allocation4], 1
    %14 = vsyncpa %s13, 0
    loop: start=0, step=1, limit=4
    $region2: #{tpu_custom_call.1} parent=1 // loop_pre_header
      _
    $region3: #{tpu_custom_call.1} parent=1 // loop_header
      %s16 = sphi 0, %s20
      %p17 = scmp.ge.s32.totalorder %s16, 4
      %s26 = sphi 0, %s28
      %s29 = sphi 0, %s26
      %s30 = sphi 0, %s29
      %s46 = sphi 0, %s30
      %s50 = sphi 0, %s50
      %s52 = sphi 0, %s50
      %s53 = sphi 0, %s52
      %s67 = sphi 0, %s53
      %s71 = sphi 0, %s71
      %s73 = sphi 0, %s71
      %s74 = sphi 0, %s73
      %s88 = sphi 0, %s74
      %s94 = sphi 0, %s96
      %s97 = sphi 0, %s94
      %s98 = sphi 0, %s97
      %s114 = sphi 0, %s98
    $region4: #{tpu_custom_call.1} parent=1 // loop_header_branch
      %19 = sbr.rel (%p17) target = $region8
    $region5: #{tpu_custom_call.1} parent=1 // loop_body
      %s21 = ssub.s32 %s16, 1
      %s22 = ssub.s32 %s16, 2
      %s23 = sadd.s32 %s16, 1
      %s24 = ssub.s32 %s16, %s23
      %p25 = scmp.eq.s32.totalorder %s24, 0
      %s27 = sadd.s32 %s26, 1
      %s28 = scalar_select %p25, %s26, %s27
      %p31 = pneg %p25
      %p32 = scmp.eq.s32.totalorder %s16, 1
      %p33 = por %p31, %p32
      %p34 = scmp.ne.s32.totalorder %s26, %s29
      %p35 = scmp.eq.s32.totalorder %s16, 0
      %p36 = por %p34, %p35
      %p37 = scmp.ne.s32.totalorder %s26, %s29
      %p38 = scmp.eq.s32.totalorder %s21, 1
      %p39 = por %p37, %p38
      %p40 = scmp.ne.s32.totalorder %s29, %s30
      %p41 = scmp.eq.s32.totalorder %s21, 0
      %p42 = por %p40, %p41
      %p43 = scmp.ne.s32.totalorder %s29, %s30
      %p44 = scmp.eq.s32.totalorder %s22, 1
      %p45 = por %p43, %p44
      %p47 = scmp.ne.s32.totalorder %s30, %s46
      %p48 = scmp.eq.s32.totalorder %s22, 0
      %p49 = por %p47, %p48
      %s51 = sadd.s32 %s50, 1
      %p54 = scmp.eq.s32.totalorder %s16, 1
      %p55 = scmp.ne.s32.totalorder %s50, %s52
      %p56 = scmp.eq.s32.totalorder %s16, 0
      %p57 = por %p55, %p56
      %p58 = scmp.ne.s32.totalorder %s50, %s52
      %p59 = scmp.eq.s32.totalorder %s21, 1
      %p60 = por %p58, %p59
      %p61 = scmp.ne.s32.totalorder %s52, %s53
      %p62 = scmp.eq.s32.totalorder %s21, 0
      %p63 = por %p61, %p62
      %p64 = scmp.ne.s32.totalorder %s52, %s53
      %p65 = scmp.eq.s32.totalorder %s22, 1
      %p66 = por %p64, %p65
      %p68 = scmp.ne.s32.totalorder %s53, %s67
      %p69 = scmp.eq.s32.totalorder %s22, 0
      %p70 = por %p68, %p69
      %s72 = sadd.s32 %s71, 1
      %p75 = scmp.eq.s32.totalorder %s16, 1
      %p76 = scmp.ne.s32.totalorder %s71, %s73
      %p77 = scmp.eq.s32.totalorder %s16, 0
      %p78 = por %p76, %p77
      %p79 = scmp.ne.s32.totalorder %s71, %s73
      %p80 = scmp.eq.s32.totalorder %s21, 1
      %p81 = por %p79, %p80
      %p82 = scmp.ne.s32.totalorder %s73, %s74
      %p83 = scmp.eq.s32.totalorder %s21, 0
      %p84 = por %p82, %p83
      %p85 = scmp.ne.s32.totalorder %s73, %s74
      %p86 = scmp.eq.s32.totalorder %s22, 1
      %p87 = por %p85, %p86
      %p89 = scmp.ne.s32.totalorder %s74, %s88
      %p90 = scmp.eq.s32.totalorder %s22, 0
      %p91 = por %p89, %p90
      %s92 = ssub.s32 %s16, %s23
      %p93 = scmp.eq.s32.totalorder %s92, 0
      %s95 = sadd.s32 %s94, 1
      %s96 = scalar_select %p93, %s94, %s95
      %p99 = pneg %p93
      %p100 = scmp.eq.s32.totalorder %s16, 1
      %p101 = por %p99, %p100
      %p102 = scmp.ne.s32.totalorder %s94, %s97
      %p103 = scmp.eq.s32.totalorder %s16, 0
      %p104 = por %p102, %p103
      %p105 = scmp.ne.s32.totalorder %s94, %s97
      %p106 = scmp.eq.s32.totalorder %s21, 1
      %p107 = por %p105, %p106
      %p108 = scmp.ne.s32.totalorder %s97, %s98
      %p109 = scmp.eq.s32.totalorder %s21, 0
      %p110 = por %p108, %p109
      %p111 = scmp.ne.s32.totalorder %s97, %s98
      %p112 = scmp.eq.s32.totalorder %s22, 1
      %p113 = por %p111, %p112
      %p115 = scmp.ne.s32.totalorder %s98, %s114
      %p116 = scmp.eq.s32.totalorder %s22, 0
      %p117 = por %p115, %p116
      %p118 = scmp.le.s32.totalorder 1, %s16
      %p119 = scmp.lt.s32.totalorder %s16, 3
      %p120 = pnand %p118, %p119
      %p121 = pneg %p120
      // Predicated region
      $region9: #{tpu_custom_call.1} parent=5 // pred_check
        _
      $region10: #{tpu_custom_call.1} parent=5 // pred_check_branch
        %123 = sbr.rel (%p120) target = $region12
      $region11: #{tpu_custom_call.1} parent=5 // pred_region
        %s124 = ssub.s32 %s16, 1
        // Predicated region
        $region13: #{tpu_custom_call.1} parent=11 // pred_check
          %p125 = pneg %p63
        $region14: #{tpu_custom_call.1} parent=11 // pred_check_branch
          %127 = sbr.rel (%p125) target = $region16
        $region15: #{tpu_custom_call.1} parent=11 // pred_region
          %s129 = ssub.s32 1024, 1024
          %130 = vsyncadd [#allocation6], %s129
          %s131 = sshll.u32 [#allocation5], 4
          %s132 = int_to_ptr.vmem [resolvable:$true] %s131
          %137 = dma.hbm_to_vmem [thread:$0]  %s1, 1024, %s132, [#allocation6], 64, 64, 4
        $region16: #{tpu_custom_call.1} parent=11 // pred_fallthru
          _
        // Predicated region
        $region17: #{tpu_custom_call.1} parent=11 // pred_check
          %p138 = pneg %p84
        $region18: #{tpu_custom_call.1} parent=11 // pred_check_branch
          %140 = sbr.rel (%p138) target = $region20
        $region19: #{tpu_custom_call.1} parent=11 // pred_region
          _
        $region20: #{tpu_custom_call.1} parent=11 // pred_fallthru
          _
      $region12: #{tpu_custom_call.1} parent=5 // pred_fallthru
        _
      %p141 = scmp.lt.s32.totalorder %s16, 2
      // Predicated region
      $region21: #{tpu_custom_call.1} parent=5 // pred_check
        %p142 = pneg %p141
      $region22: #{tpu_custom_call.1} parent=5 // pred_check_branch
        %144 = sbr.rel (%p142) target = $region24
      $region23: #{tpu_custom_call.1} parent=5 // pred_region
        // Predicated region
        $region25: #{tpu_custom_call.1} parent=23 // pred_check
          %p145 = pneg %p36
        $region26: #{tpu_custom_call.1} parent=23 // pred_check_branch
          %147 = sbr.rel (%p145) target = $region28
        $region27: #{tpu_custom_call.1} parent=23 // pred_region
          %s148 = sand.u32 %s26, 1
          %s149 = scalar_lea.sflag [#allocation3], %s148
          %s150 = sand.u32 %s26, 1
          %s151 = smul.addr %s150, 8
          %s152 = scalar_lea.vmem [#allocation2], %s151
          %s154 = ssub.s32 128, 128
          %155 = vsyncadd %s149, %s154
          %s156 = smul.addr %s16, 128
          %s157 = scalar_lea.hbm %s0, %s156
          %s159 = sshll.u32 %s152, 4
          %s160 = int_to_ptr.vmem [resolvable:$true] %s159
          %162 = dma.hbm_to_vmem [thread:$0]  %s157, 128, %s160, %s149
        $region28: #{tpu_custom_call.1} parent=23 // pred_fallthru
          _
      $region24: #{tpu_custom_call.1} parent=5 // pred_fallthru
        _
      %p163 = scmp.le.s32.totalorder 1, %s16
      %p164 = scmp.lt.s32.totalorder %s16, 3
      %p165 = pnand %p163, %p164
      %p166 = pneg %p165
      // Predicated region
      $region29: #{tpu_custom_call.1} parent=5 // pred_check
        _
      $region30: #{tpu_custom_call.1} parent=5 // pred_check_branch
        %168 = sbr.rel (%p165) target = $region32
      $region31: #{tpu_custom_call.1} parent=5 // pred_region
        %s169 = ssub.s32 %s16, 1
        %s170 = sand.u32 %s29, 1
        %s171 = scalar_lea.sflag [#allocation3], %s170
        %s172 = sand.u32 %s29, 1
        %s173 = smul.addr %s172, 8
        %s174 = scalar_lea.vmem [#allocation2], %s173
        // Predicated region
        $region33: #{tpu_custom_call.1} parent=31 // pred_check
          %p175 = pneg %p42
        $region34: #{tpu_custom_call.1} parent=31 // pred_check_branch
          %177 = sbr.rel (%p175) target = $region36
        $region35: #{tpu_custom_call.1} parent=31 // pred_region
          %178 = dma.done %s171, 128
        $region36: #{tpu_custom_call.1} parent=31 // pred_fallthru
          _
        // Predicated region
        $region37: #{tpu_custom_call.1} parent=31 // pred_check
          %p179 = pneg %p63
        $region38: #{tpu_custom_call.1} parent=31 // pred_check_branch
          %181 = sbr.rel (%p179) target = $region40
        $region39: #{tpu_custom_call.1} parent=31 // pred_region
          %182 = dma.done [#allocation6], 1024
        $region40: #{tpu_custom_call.1} parent=31 // pred_fallthru
          _
        %s183 = sand.u32 %s29, 1
        %s184 = scalar_lea.sflag [#allocation3], %s183
        %s185 = sand.u32 %s29, 1
        %s186 = smul.addr %s185, 8
        %s187 = scalar_lea.vmem [#allocation2], %s186
        %p188 = pneg %p42
        %p189 = pneg %p39
        %p190 = pneg %p63
        %p191 = pneg %p60
        %p192 = pneg %p84
        %p193 = pneg %p81
        %p194 = pneg %p110
        %p195 = pneg %p107
        %s196 = sand.u32 %s97, 1
        %s197 = scalar_lea.sflag [#allocation4], %s196
        %s198 = sand.u32 %s97, 1
        %s199 = smul.addr %s198, 8
        %s200 = scalar_lea.vmem [#allocation7], %s199
        %v202 = vld [vmem:[%s174] sm:$0xff]
        %v203 = vld [vmem:[#allocation5] sm:$0xf]
        %v204 = vld [vmem:[#allocation5 + $0x4] sm:$0xf]
        %v205 = vld [vmem:[#allocation5 + $0x8] sm:$0xf]
        %v206 = vld [vmem:[#allocation5 + $0xc] sm:$0xf]
        %v207 = vld [vmem:[#allocation5 + $0x10] sm:$0xf]
        %v208 = vld [vmem:[#allocation5 + $0x14] sm:$0xf]
        %v209 = vld [vmem:[#allocation5 + $0x18] sm:$0xf]
        %v210 = vld [vmem:[#allocation5 + $0x1c] sm:$0xf]
        %v211 = vld [vmem:[#allocation5 + $0x20] sm:$0xf]
        %v212 = vld [vmem:[#allocation5 + $0x24] sm:$0xf]
        %v213 = vld [vmem:[#allocation5 + $0x28] sm:$0xf]
        %v214 = vld [vmem:[#allocation5 + $0x2c] sm:$0xf]
        %v215 = vld [vmem:[#allocation5 + $0x30] sm:$0xf]
        %v216 = vld [vmem:[#allocation5 + $0x34] sm:$0xf]
        %v217 = vld [vmem:[#allocation5 + $0x38] sm:$0xf]
        %v218 = vld [vmem:[#allocation5 + $0x3c] sm:$0xf]
        %v219 = vld [vmem:[%s2] sm:$0x1]
        %v221 = vlaneseq
        %v222 = vshrl.u32 %v221, 7
        %v223 = vsub.s32 0, %v222
        %v224 = vrot.slane %v219, %v223
        %v226 = vpack.c.bf16 %v202, %v202
        %v243 = vunpack.c.l.b16 %v203
        %v244 = vunpack.c.l.b16 %v204
        %v245 = vunpack.c.l.b16 %v205
        %v246 = vunpack.c.l.b16 %v206
        %v247 = vunpack.c.l.b16 %v207
        %v248 = vunpack.c.l.b16 %v208
        %v249 = vunpack.c.l.b16 %v209
        %v250 = vunpack.c.l.b16 %v210
        %v251 = vunpack.c.l.b16 %v211
        %v252 = vunpack.c.l.b16 %v212
        %v253 = vunpack.c.l.b16 %v213
        %v254 = vunpack.c.l.b16 %v214
        %v255 = vunpack.c.l.b16 %v215
        %v256 = vunpack.c.l.b16 %v216
        %v257 = vunpack.c.l.b16 %v217
        %v258 = vunpack.c.l.b16 %v218
        %v259 = vpack.c.b16 %v244, %v243
        %v260 = vpack.c.b16 %v246, %v245
        %v261 = vpack.c.b16 %v248, %v247
        %v262 = vpack.c.b16 %v250, %v249
        %v263 = vpack.c.b16 %v252, %v251
        %v264 = vpack.c.b16 %v254, %v253
        %v265 = vpack.c.b16 %v256, %v255
        %v266 = vpack.c.b16 %v258, %v257
        %275 = vmatprep.subr.bf16.mxu0 0
        %276 = vmatpush1.bf16.msra.mxu0 %v259
        %277 = vmatprep.subr.bf16.mxu0 0
        %278 = vmatpush1.bf16.msra.mxu0 %v260
        %279 = vmatprep.subr.bf16.mxu0 0
        %280 = vmatpush1.bf16.msra.mxu0 %v261
        %281 = vmatprep.subr.bf16.mxu0 0
        %282 = vmatpush1.bf16.msra.mxu0 %v262
        %283 = vmatprep.subr.bf16.mxu0 0
        %284 = vmatpush1.bf16.msra.mxu0 %v263
        %285 = vmatprep.subr.bf16.mxu0 0
        %286 = vmatpush1.bf16.msra.mxu0 %v264
        %287 = vmatprep.subr.bf16.mxu0 0
        %288 = vmatpush1.bf16.msra.mxu0 %v265
        %289 = vmatprep.subr.bf16.mxu0 0
        %290 = vmatpush1.bf16.msra.mxu0 %v266
        %291 = vmatprep.subr.bf16.mxu0 0
        %292 = vmatpush1.bf16.msra.mxu0 0
        %293 = vmatprep.subr.bf16.mxu0 0
        %294 = vmatpush1.bf16.msra.mxu0 0
        %295 = vmatprep.subr.bf16.mxu0 0
        %296 = vmatpush1.bf16.msra.mxu0 0
        %297 = vmatprep.subr.bf16.mxu0 0
        %298 = vmatpush1.bf16.msra.mxu0 0
        %299 = vmatprep.subr.bf16.mxu0 0
        %300 = vmatpush1.bf16.msra.mxu0 0
        %301 = vmatprep.subr.bf16.mxu0 0
        %302 = vmatpush1.bf16.msra.mxu0 0
        %303 = vmatprep.subr.bf16.mxu0 0
        %304 = vmatpush1.bf16.msra.mxu0 0
        %305 = vmatprep.subr.bf16.mxu0 0
        %306 = vmatpush1.bf16.msra.mxu0 0
        %307 = vmatprep.mubr.bf16.mxu0 0
        %308 = vmatmul.mubr.bf16.gmra.mrb[0].mxu0 %v226
        %v309 = vpop.f32.mrb[0].mxu0
        %v310 = vadd.f32 %v224, %v309
        %v311 = vpop.f32.mrb[0].mxu0
        %v312 = vpop.f32.mrb[0].mxu0
        %v313 = vpop.f32.mrb[0].mxu0
        %314 = vdwg.mxu0
        %v315 = vxor.u32 %v310, 2147483648
        %v316 = vmul.f32 %v315, 1.442695
        %v317 = vpow.pop %v316
        %v318 = vadd.f32 %v317, 1.0
        %v319 = vrcp.pop %v318
        %v320 = vmul.f32 1.0, %v319
        %v321 = vmul.f32 %v310, %v320
        %v322 = vadd.f32 %v202, %v321
        %v323 = vpack.c.bf16 %v322, %v322
        %324 = vmatprep.subr.bf16.mxu0 0
        %325 = vmatpush1.bf16.msra.mxu0 %v259
        %326 = vmatprep.subr.bf16.mxu0 0
        %327 = vmatpush1.bf16.msra.mxu0 %v260
        %328 = vmatprep.subr.bf16.mxu0 0
        %329 = vmatpush1.bf16.msra.mxu0 %v261
        %330 = vmatprep.subr.bf16.mxu0 0
        %331 = vmatpush1.bf16.msra.mxu0 %v262
        %332 = vmatprep.subr.bf16.mxu0 0
        %333 = vmatpush1.bf16.msra.mxu0 %v263
        %334 = vmatprep.subr.bf16.mxu0 0
        %335 = vmatpush1.bf16.msra.mxu0 %v264
        %336 = vmatprep.subr.bf16.mxu0 0
        %337 = vmatpush1.bf16.msra.mxu0 %v265
        %338 = vmatprep.subr.bf16.mxu0 0
        %339 = vmatpush1.bf16.msra.mxu0 %v266
        %340 = vmatprep.subr.bf16.mxu0 0
        %341 = vmatpush1.bf16.msra.mxu0 0
        %342 = vmatprep.subr.bf16.mxu0 0
        %343 = vmatpush1.bf16.msra.mxu0 0
        %344 = vmatprep.subr.bf16.mxu0 0
        %345 = vmatpush1.bf16.msra.mxu0 0
        %346 = vmatprep.subr.bf16.mxu0 0
        %347 = vmatpush1.bf16.msra.mxu0 0
        %348 = vmatprep.subr.bf16.mxu0 0
        %349 = vmatpush1.bf16.msra.mxu0 0
        %350 = vmatprep.subr.bf16.mxu0 0
        %351 = vmatpush1.bf16.msra.mxu0 0
        %352 = vmatprep.subr.bf16.mxu0 0
        %353 = vmatpush1.bf16.msra.mxu0 0
        %354 = vmatprep.subr.bf16.mxu0 0
        %355 = vmatpush1.bf16.msra.mxu0 0
        %356 = vmatprep.mubr.bf16.mxu0 0
        %357 = vmatmul.mubr.bf16.gmra.mrb[0].mxu0 %v323
        %v358 = vpop.f32.mrb[0].mxu0
        %v359 = vadd.f32 %v224, %v358
        %v360 = vpop.f32.mrb[0].mxu0
        %v361 = vpop.f32.mrb[0].mxu0
        %v362 = vpop.f32.mrb[0].mxu0
        %363 = vdwg.mxu0
        %v364 = vxor.u32 %v359, 2147483648
        %v365 = vmul.f32 %v364, 1.442695
        %v366 = vpow.pop %v365
        %v367 = vadd.f32 %v366, 1.0
        %v368 = vrcp.pop %v367
        %v369 = vmul.f32 1.0, %v368
        %v370 = vmul.f32 %v359, %v369
        %v371 = vadd.f32 %v322, %v370
        %372 = vst [vmem:[%s200] sm:$0xff] %v371
        %s373 = sand.u32 %s97, 1
        %s374 = scalar_lea.sflag [#allocation4], %s373
        %s375 = sand.u32 %s97, 1
        %s376 = smul.addr %s375, 8
        %s377 = scalar_lea.vmem [#allocation7], %s376
        // Predicated region
        $region41: #{tpu_custom_call.1} parent=31 // pred_check
          %p378 = pneg %p107
        $region42: #{tpu_custom_call.1} parent=31 // pred_check_branch
          %380 = sbr.rel (%p378) target = $region44
        $region43: #{tpu_custom_call.1} parent=31 // pred_region
          %s382 = ssub.s32 128, 128
          %383 = vsyncadd %s374, %s382
          %s384 = smul.addr %s21, 128
          %s385 = scalar_lea.hbm %s3, %s384
          %s387 = sshll.u32 %s377, 4
          %s388 = int_to_ptr.vmem [resolvable:$true] %s387
          %390 = dma.vmem_to_hbm [thread:$0]  %s388, 128, %s385, %s374
        $region44: #{tpu_custom_call.1} parent=31 // pred_fallthru
          _
      $region32: #{tpu_custom_call.1} parent=5 // pred_fallthru
        _
      %p391 = scmp.le.s32.totalorder 2, %s16
      // Predicated region
      $region45: #{tpu_custom_call.1} parent=5 // pred_check
        %p392 = pneg %p391
      $region46: #{tpu_custom_call.1} parent=5 // pred_check_branch
        %394 = sbr.rel (%p392) target = $region48
      $region47: #{tpu_custom_call.1} parent=5 // pred_region
        %s395 = ssub.s32 %s16, 2
        // Predicated region
        $region49: #{tpu_custom_call.1} parent=47 // pred_check
          %p396 = pneg %p113
        $region50: #{tpu_custom_call.1} parent=47 // pred_check_branch
          %398 = sbr.rel (%p396) target = $region52
        $region51: #{tpu_custom_call.1} parent=47 // pred_region
          %s399 = sand.u32 %s98, 1
          %s400 = scalar_lea.sflag [#allocation4], %s399
          %s401 = sand.u32 %s98, 1
          %s402 = smul.addr %s401, 8
          %s403 = scalar_lea.vmem [#allocation7], %s402
          %404 = dma.done %s400, 128
        $region52: #{tpu_custom_call.1} parent=47 // pred_fallthru
          _
      $region48: #{tpu_custom_call.1} parent=5 // pred_fallthru
        _
    $region6: #{tpu_custom_call.1} parent=1 // loop_footer
      %s20 = sadd.s32 1, %s16
    $region7: #{tpu_custom_call.1} parent=1 // loop_footer_branch
      %15 = sbr.rel target = $region3
    $region8: #{tpu_custom_call.1} parent=1 // loop_exit
      _
    %405 = vsyncpa [#allocation3], 1
    %s406 = scalar_lea.sflag [#allocation3], 1
    %407 = vsyncpa %s406, 1
    %408 = vsyncpa [#allocation6], 1
    %409 = vsyncpa [#allocation4], 1
    %s410 = scalar_lea.sflag [#allocation4], 1
    %411 = vsyncpa %s410, 1

</llo_original>
